<compile_context>
chip_gen: v6e
topology: v6e:2x2x1
jax: 0.10.0
libtpu: 0.0.40
codegen_flags: <defaults>
</compile_context>

<pallas_src>
import functools

import jax
import jax.numpy as jnp
from jax import lax
from jax.experimental import pallas as pl
from jax.experimental.pallas import tpu as pltpu


def _round_up(a: int, m: int) -> int:
    return ((a + m - 1) // m) * m


def _largest_divisor_leq(n: int, cap: int) -> int:
    cap = max(1, min(n, cap))
    for d in range(cap, 0, -1):
        if n % d == 0:
            return d
    return 1


def _pick_tile_s(s: int, max_tile_s: int) -> int:
    """Multiple of 128; prefers a divisor of round_up(S,128) (no wasted tail tile)."""
    s_ru = _round_up(s, 128)
    cap = max(128, (min(max_tile_s, s_ru) // 128) * 128)
    best = 128
    for t in range(cap, 0, -128):
        if s_ru % t == 0:
            best = t
            break
    if best < cap // 2:
        best = cap  # accept a partially masked final tile rather than tiny DMAs
    return best


def _pick_chunk(tile_s: int, chunk_lanes: int) -> int:
    c = max(128, min(tile_s, (chunk_lanes // 128) * 128))
    while tile_s % c:
        c -= 128
    return c


def _stfet_partial_sum_kernel(x_ref, w1a_ref, o_ref, xa_ref, *,
                              tile_l, tile_s, chunk, n_chunks, s_total, ragged):
    """Accumulate sum_{L-chunk, S-tile} relu(W1^T x + b1) per (batch, split).

    Grid: (B, NSPLIT, L_blocks_per_split, S_tiles); the last two axes are the
    reduction, so the o_ref block ([1, 1, Ch, 1], f32) stays resident across
    them and acts as the accumulator.
    """
    lc = pl.program_id(2)
    t = pl.program_id(3)

    @pl.when(jnp.logical_and(lc == 0, t == 0))
    def _init():
        o_ref[...] = jnp.zeros_like(o_ref)

    w1a = w1a_ref[...]                      # [Ch, Ci+1]; last column is b1
    ch = w1a.shape[0]
    ci = w1a.shape[1] - 1

    # Ones row of the augmented input (folds b1 into the MXU op). Rows 0..Ci-1
    # are overwritten per chunk; the ones row persists for the whole grid step.
    xa_ref[ci:ci + 1, :] = jnp.ones((1, chunk), xa_ref.dtype)

    def make_body(li):                       # li is a *static* L index
        def body(c, acc):
            start = pl.multiple_of(c * chunk, 128)
            # Stage the x chunk under the ones row -> augmented [Ci+1, chunk].
            xa_ref[0:ci, :] = x_ref[0, li, :, pl.ds(start, chunk)]
            # stfet layer 1 (+ bias) on the MXU, f32 accumulation.
            h = jnp.dot(w1a, xa_ref[...], preferred_element_type=jnp.float32)
            h = jnp.maximum(h, 0.0)          # ReLU (VPU)
            if ragged:
                # Mask the tail lanes of the partial last spatial tile
                # (select AFTER the ReLU so garbage/NaN never reaches the sum).
                off = (t * tile_s + start
                       + lax.broadcasted_iota(jnp.int32, (1, chunk), 1))
                h = jnp.where(off < s_total, h, 0.0)
            return acc + jnp.sum(h, axis=1, keepdims=True)   # gap partial
        return body

    acc = jnp.zeros((ch, 1), jnp.float32)
    for li in range(tile_l):
        acc = lax.fori_loop(0, n_chunks, make_body(li), acc,
                            unroll=(n_chunks <= 8))
    o_ref[...] += acc[None, None]            # [1, 1, Ch, 1], VMEM-resident


def transvfs_forward(x, w1, b1, w2, b2, *, max_tile_s=16384,
                     target_block_bytes=4 << 20, chunk_lanes=2048,
                     tile_l=None, num_splits=None):
    """x: [B, L, Ci, D, H, W] (PyTorch layout)  ->  [B, Co]."""
    B, L, Ci, D, H, W = x.shape
    Ch = w1.shape[1]
    Co = w2.shape[1]
    S = D * H * W
    N = L * S

    # Channels-first, spatial-last flatten: pure reshape, NO HBM rewrite,
    # no pad, no dtype cast.
    xf = x.reshape(B, L, Ci, S)
    itemsize = jnp.dtype(xf.dtype).itemsize

    tile_s = _pick_tile_s(S, max_tile_s)
    chunk = _pick_chunk(tile_s, chunk_lanes)
    n_chunks = tile_s // chunk
    s_tiles = pl.cdiv(S, tile_s)
    ragged = (S % tile_s) != 0

    if tile_l is None:
        want_l = max(1, target_block_bytes // (Ci * tile_s * itemsize))
        tile_l = _largest_divisor_leq(L, want_l)
    assert L % tile_l == 0, (L, tile_l)
    l_blocks = L // tile_l

    if num_splits is None:
        # Keep both v7x TensorCores busy even at B == 1 by splitting the L
        # reduction into per-core partials (combined exactly in the epilogue).
        num_splits = 2 if (B == 1 and l_blocks % 2 == 0 and l_blocks >= 2) else 1
    assert l_blocks % num_splits == 0, (l_blocks, num_splits)
    lbs = l_blocks // num_splits

    # Augmented weight: bias folded in as the last column (x gets a ones row).
    w1a = jnp.concatenate([jnp.transpose(w1), b1.reshape(Ch, 1)], axis=1)
    w1a = w1a.astype(xf.dtype)                                  # [Ch, Ci+1]

    kernel = functools.partial(
        _stfet_partial_sum_kernel, tile_l=tile_l, tile_s=tile_s, chunk=chunk,
        n_chunks=n_chunks, s_total=S, ragged=ragged)

    grid = (B, num_splits, lbs, s_tiles)

    block_bytes = tile_l * Ci * tile_s * itemsize
    vmem_need = 2 * block_bytes + 2 * (Ci + 1) * chunk * itemsize + (8 << 20)
    compiler_params = pltpu.CompilerParams(
        dimension_semantics=("parallel", "parallel", "arbitrary", "arbitrary"),
        vmem_limit_bytes=int(min(60 << 20, max(32 << 20, vmem_need))))

    cost = pl.CostEstimate(
        flops=2 * B * L * s_tiles * tile_s * (Ci + 1) * Ch,
        transcendentals=0,
        bytes_accessed=int(xf.size * itemsize + w1a.size * itemsize
                           + B * num_splits * Ch * 4))

    part = pl.pallas_call(
        kernel,
        out_shape=jax.ShapeDtypeStruct((B, num_splits, Ch, 1), jnp.float32),
        grid_spec=pltpu.PrefetchScalarGridSpec(
            num_scalar_prefetch=0,
            grid=grid,
            in_specs=[
                pl.BlockSpec((1, tile_l, Ci, tile_s),
                             lambda b, sp, lc, t: (b, sp * lbs + lc, 0, t)),
                pl.BlockSpec((Ch, Ci + 1), lambda b, sp, lc, t: (0, 0)),
            ],
            out_specs=pl.BlockSpec((1, 1, Ch, 1),
                                   lambda b, sp, lc, t: (b, sp, 0, 0)),
            scratch_shapes=[pltpu.VMEM((Ci + 1, chunk), xf.dtype)],
        ),
        compiler_params=compiler_params,
        cost_estimate=cost,
    )(xf, w1a)

    # Epilogue (tiny, exact): combine splits, global mean, stfet layer 2 + b2.
    # gap(linear(.)) == linear(gap(.)) since the second pointwise conv is linear.
    pooled = jnp.sum(part[..., 0], axis=1) * (1.0 / float(N))        # [B, Ch]
    y = pooled @ w2.astype(jnp.float32) + b2.astype(jnp.float32)     # [B, Co]
    return y.astype(x.dtype)


def transvfs_reference(x, w1, b1, w2, b2):
    """Pure-JAX f32 reference of the same forward (module form, no hoist)."""
    B, L, Ci, D, H, W = x.shape
    xfl = jnp.transpose(x, (0, 1, 3, 4, 5, 2)).reshape(B, L * D * H * W, Ci)
    h = jnp.maximum(
        jnp.dot(xfl.astype(jnp.float32), w1.astype(jnp.float32),
                preferred_element_type=jnp.float32) + b1.astype(jnp.float32), 0.0)
    y = jnp.dot(h, w2.astype(jnp.float32),
                preferred_element_type=jnp.float32) + b2.astype(jnp.float32)
    return jnp.mean(y, axis=1).astype(x.dtype)


if __name__ == "__main__":
    def run_case(name, B, L, Ci, D, H, W, Ch, Co, **kw):
        key = jax.random.PRNGKey(0)
        kx, k1, k2, k3, k4 = jax.random.split(key, 5)
        x = jax.random.normal(kx, (B, L, Ci, D, H, W), dtype=jnp.float32)
        w1 = jax.random.normal(k1, (Ci, Ch), dtype=jnp.float32) * 0.2
        b1 = jax.random.normal(k2, (Ch,), dtype=jnp.float32) * 0.1
        w2 = jax.random.normal(k3, (Ch, Co), dtype=jnp.float32) * 0.2
        b2 = jax.random.normal(k4, (Co,), dtype=jnp.float32) * 0.1

        out = jax.block_until_ready(transvfs_forward(x, w1, b1, w2, b2, **kw))
        assert out.shape == (B, Co), (name, out.shape)
        ref = jax.block_until_ready(transvfs_reference(x, w1, b1, w2, b2))
        assert jnp.allclose(out, ref, atol=5e-3, rtol=5e-3), (name, out, ref)

    # Case 1: lane-aligned spatial size (S = 256), B = 2, single-split path.
    run_case("aligned", B=2, L=4, Ci=4, D=4, H=8, W=8, Ch=32, Co=8)
    # Case 2: ragged spatial size (S = 180, in-kernel tail mask) with B = 1 and
    # the 2-way L-reduction split (exercises the v7x dual-TC path).
    run_case("ragged_split", B=1, L=8, Ci=4, D=3, H=6, W=10, Ch=32, Co=8,
             tile_l=2)

    print("KERNEL_OK")
</pallas_src>

<mosaic_0001>
module attributes {stable_mosaic.version = 11 : i64} {
  func.func @_stfet_partial_sum_kernel(%arg0: i32, %arg1: i32, %arg2: i32, %arg3: i32, %arg4: memref<1x4x4x256xf32, #tpu.memory_space<vmem>>, %arg5: memref<32x5xf32, #tpu.memory_space<vmem>>, %arg6: memref<1x1x32x1xf32, #tpu.memory_space<vmem>>, %arg7: memref<5x256xf32, #tpu.memory_space<vmem>>) attributes {dimension_semantics = [#tpu.dimension_semantics<parallel>, #tpu.dimension_semantics<parallel>, #tpu.dimension_semantics<arbitrary>, #tpu.dimension_semantics<arbitrary>], iteration_bounds = array<i64: 2, 1, 1, 1>, scalar_prefetch = 0 : i64, scratch_operands = 1 : i64, tpu.core_type = #tpu.core_type<tc>, window_params = [{transform_indices = @transform_0, window_bounds = array<i64: 1, 4, 4, 256>}, {pipeline_mode = #tpu.pipeline_mode<synchronous>, transform_indices = @transform_1, window_bounds = array<i64: 32, 5>}, {transform_indices = @transform_2, window_bounds = array<i64: 1, 1, 32, 1>}]} {
    %c0_i32 = arith.constant 0 : i32
    %0 = arith.cmpi eq, %arg2, %c0_i32 : i32
    %c0_i32_0 = arith.constant 0 : i32
    %1 = arith.cmpi eq, %arg3, %c0_i32_0 : i32
    %2 = arith.andi %0, %1 : i1
    %3 = arith.extui %2 : i1 to i32
    %c0_i32_1 = arith.constant 0 : i32
    %4 = arith.cmpi ne, %3, %c0_i32_1 : i32
    scf.if %4 {
      %cst_60 = arith.constant 0.000000e+00 : f32
      %65 = vector.broadcast %cst_60 : f32 to vector<1x1x32x1xf32>
      %c0_61 = arith.constant 0 : index
      %c0_62 = arith.constant 0 : index
      %c0_63 = arith.constant 0 : index
      %c0_64 = arith.constant 0 : index
      %66 = vector.load %arg6[%c0_61, %c0_62, %c0_63, %c0_64] : memref<1x1x32x1xf32, #tpu.memory_space<vmem>>, vector<1x1x32x1xf32>
      tpu.vector_store %arg6[%c0_61, %c0_62, %c0_63, %c0_64], %65 {strides = array<i32>} : memref<1x1x32x1xf32, #tpu.memory_space<vmem>>, vector<1x1x32x1xf32>,
    } else {
    }
    %c0 = arith.constant 0 : index
    %c0_2 = arith.constant 0 : index
    %5 = vector.load %arg5[%c0, %c0_2] : memref<32x5xf32, #tpu.memory_space<vmem>>, vector<32x5xf32>
    %cst = arith.constant 1.000000e+00 : f32
    %6 = vector.broadcast %cst : f32 to vector<1x256xf32>
    %c4 = arith.constant 4 : index
    %c0_3 = arith.constant 0 : index
    %7 = vector.load %arg7[%c4, %c0_3] : memref<5x256xf32, #tpu.memory_space<vmem>>, vector<1x256xf32>
    tpu.vector_store %arg7[%c4, %c0_3], %6 {strides = array<i32>} : memref<5x256xf32, #tpu.memory_space<vmem>>, vector<1x256xf32>,
    %cst_4 = arith.constant 0.000000e+00 : f32
    %8 = vector.broadcast %cst_4 : f32 to vector<32x1xf32>
    %c0_i32_5 = arith.constant 0 : i32
    %c256_i32 = arith.constant 256 : i32
    %9 = arith.muli %c0_i32_5, %c256_i32 : i32
    %10 = tpu.assume_multiple %9, 128 : i32
    %c0_6 = arith.constant 0 : index
    %c0_7 = arith.constant 0 : index
    %c0_8 = arith.constant 0 : index
    %11 = arith.index_cast %10 : i32 to index
    %12 = vector.load %arg4[%c0_6, %c0_7, %c0_8, %11] : memref<1x4x4x256xf32, #tpu.memory_space<vmem>>, vector<1x1x4x256xf32>
    %13 = vector.shape_cast %12 : vector<1x1x4x256xf32> to vector<4x256xf32>
    %c0_9 = arith.constant 0 : index
    %c0_10 = arith.constant 0 : index
    %14 = vector.load %arg7[%c0_9, %c0_10] : memref<5x256xf32, #tpu.memory_space<vmem>>, vector<4x256xf32>
    tpu.vector_store %arg7[%c0_9, %c0_10], %13 {strides = array<i32>} : memref<5x256xf32, #tpu.memory_space<vmem>>, vector<4x256xf32>,
    %c0_11 = arith.constant 0 : index
    %c0_12 = arith.constant 0 : index
    %15 = vector.load %arg7[%c0_11, %c0_12] : memref<5x256xf32, #tpu.memory_space<vmem>>, vector<5x256xf32>
    %cst_13 = arith.constant dense<0.000000e+00> : vector<32x256xf32>
    %16 = tpu.matmul %5, %15, %cst_13 {dimension_numbers = #tpu.dot_dimension_numbers<[1], [0], [0], [1], [0, 0, 1, 1], [], []>} : vector<32x5xf32>, vector<5x256xf32>, vector<32x256xf32> -> vector<32x256xf32>
    %cst_14 = arith.constant 0.000000e+00 : f32
    %17 = vector.broadcast %cst_14 : f32 to vector<32x256xf32>
    %18 = arith.maximumf %16, %17 : vector<32x256xf32>
    %cst_15 = arith.constant dense<0.000000e+00> : vector<32xf32>
    %19 = vector.multi_reduction <add>, %18, %cst_15 [1] : vector<32x256xf32> to vector<32xf32>
    %20 = vector.shape_cast %19 : vector<32xf32> to vector<32x1xf32>
    %21 = arith.addf %8, %20 : vector<32x1xf32>
    %c1_i32 = arith.constant 1 : i32
    %c0_i32_16 = arith.constant 0 : i32
    %c256_i32_17 = arith.constant 256 : i32
    %22 = arith.muli %c0_i32_16, %c256_i32_17 : i32
    %23 = tpu.assume_multiple %22, 128 : i32
    %c0_18 = arith.constant 0 : index
    %c1 = arith.constant 1 : index
    %c0_19 = arith.constant 0 : index
    %24 = arith.index_cast %23 : i32 to index
    %25 = vector.load %arg4[%c0_18, %c1, %c0_19, %24] : memref<1x4x4x256xf32, #tpu.memory_space<vmem>>, vector<1x1x4x256xf32>
    %26 = vector.shape_cast %25 : vector<1x1x4x256xf32> to vector<4x256xf32>
    %c0_20 = arith.constant 0 : index
    %c0_21 = arith.constant 0 : index
    %27 = vector.load %arg7[%c0_20, %c0_21] : memref<5x256xf32, #tpu.memory_space<vmem>>, vector<4x256xf32>
    tpu.vector_store %arg7[%c0_20, %c0_21], %26 {strides = array<i32>} : memref<5x256xf32, #tpu.memory_space<vmem>>, vector<4x256xf32>,
    %c0_22 = arith.constant 0 : index
    %c0_23 = arith.constant 0 : index
    %28 = vector.load %arg7[%c0_22, %c0_23] : memref<5x256xf32, #tpu.memory_space<vmem>>, vector<5x256xf32>
    %cst_24 = arith.constant dense<0.000000e+00> : vector<32x256xf32>
    %29 = tpu.matmul %5, %28, %cst_24 {dimension_numbers = #tpu.dot_dimension_numbers<[1], [0], [0], [1], [0, 0, 1, 1], [], []>} : vector<32x5xf32>, vector<5x256xf32>, vector<32x256xf32> -> vector<32x256xf32>
    %cst_25 = arith.constant 0.000000e+00 : f32
    %30 = vector.broadcast %cst_25 : f32 to vector<32x256xf32>
    %31 = arith.maximumf %29, %30 : vector<32x256xf32>
    %cst_26 = arith.constant dense<0.000000e+00> : vector<32xf32>
    %32 = vector.multi_reduction <add>, %31, %cst_26 [1] : vector<32x256xf32> to vector<32xf32>
    %33 = vector.shape_cast %32 : vector<32xf32> to vector<32x1xf32>
    %34 = arith.addf %21, %33 : vector<32x1xf32>
    %c1_i32_27 = arith.constant 1 : i32
    %c0_i32_28 = arith.constant 0 : i32
    %c256_i32_29 = arith.constant 256 : i32
    %35 = arith.muli %c0_i32_28, %c256_i32_29 : i32
    %36 = tpu.assume_multiple %35, 128 : i32
    %c0_30 = arith.constant 0 : index
    %c2 = arith.constant 2 : index
    %c0_31 = arith.constant 0 : index
    %37 = arith.index_cast %36 : i32 to index
    %38 = vector.load %arg4[%c0_30, %c2, %c0_31, %37] : memref<1x4x4x256xf32, #tpu.memory_space<vmem>>, vector<1x1x4x256xf32>
    %39 = vector.shape_cast %38 : vector<1x1x4x256xf32> to vector<4x256xf32>
    %c0_32 = arith.constant 0 : index
    %c0_33 = arith.constant 0 : index
    %40 = vector.load %arg7[%c0_32, %c0_33] : memref<5x256xf32, #tpu.memory_space<vmem>>, vector<4x256xf32>
    tpu.vector_store %arg7[%c0_32, %c0_33], %39 {strides = array<i32>} : memref<5x256xf32, #tpu.memory_space<vmem>>, vector<4x256xf32>,
    %c0_34 = arith.constant 0 : index
    %c0_35 = arith.constant 0 : index
    %41 = vector.load %arg7[%c0_34, %c0_35] : memref<5x256xf32, #tpu.memory_space<vmem>>, vector<5x256xf32>
    %cst_36 = arith.constant dense<0.000000e+00> : vector<32x256xf32>
    %42 = tpu.matmul %5, %41, %cst_36 {dimension_numbers = #tpu.dot_dimension_numbers<[1], [0], [0], [1], [0, 0, 1, 1], [], []>} : vector<32x5xf32>, vector<5x256xf32>, vector<32x256xf32> -> vector<32x256xf32>
    %cst_37 = arith.constant 0.000000e+00 : f32
    %43 = vector.broadcast %cst_37 : f32 to vector<32x256xf32>
    %44 = arith.maximumf %42, %43 : vector<32x256xf32>
    %cst_38 = arith.constant dense<0.000000e+00> : vector<32xf32>
    %45 = vector.multi_reduction <add>, %44, %cst_38 [1] : vector<32x256xf32> to vector<32xf32>
    %46 = vector.shape_cast %45 : vector<32xf32> to vector<32x1xf32>
    %47 = arith.addf %34, %46 : vector<32x1xf32>
    %c1_i32_39 = arith.constant 1 : i32
    %c0_i32_40 = arith.constant 0 : i32
    %c256_i32_41 = arith.constant 256 : i32
    %48 = arith.muli %c0_i32_40, %c256_i32_41 : i32
    %49 = tpu.assume_multiple %48, 128 : i32
    %c0_42 = arith.constant 0 : index
    %c3 = arith.constant 3 : index
    %c0_43 = arith.constant 0 : index
    %50 = arith.index_cast %49 : i32 to index
    %51 = vector.load %arg4[%c0_42, %c3, %c0_43, %50] : memref<1x4x4x256xf32, #tpu.memory_space<vmem>>, vector<1x1x4x256xf32>
    %52 = vector.shape_cast %51 : vector<1x1x4x256xf32> to vector<4x256xf32>
    %c0_44 = arith.constant 0 : index
    %c0_45 = arith.constant 0 : index
    %53 = vector.load %arg7[%c0_44, %c0_45] : memref<5x256xf32, #tpu.memory_space<vmem>>, vector<4x256xf32>
    tpu.vector_store %arg7[%c0_44, %c0_45], %52 {strides = array<i32>} : memref<5x256xf32, #tpu.memory_space<vmem>>, vector<4x256xf32>,
    %c0_46 = arith.constant 0 : index
    %c0_47 = arith.constant 0 : index
    %54 = vector.load %arg7[%c0_46, %c0_47] : memref<5x256xf32, #tpu.memory_space<vmem>>, vector<5x256xf32>
    %cst_48 = arith.constant dense<0.000000e+00> : vector<32x256xf32>
    %55 = tpu.matmul %5, %54, %cst_48 {dimension_numbers = #tpu.dot_dimension_numbers<[1], [0], [0], [1], [0, 0, 1, 1], [], []>} : vector<32x5xf32>, vector<5x256xf32>, vector<32x256xf32> -> vector<32x256xf32>
    %cst_49 = arith.constant 0.000000e+00 : f32
    %56 = vector.broadcast %cst_49 : f32 to vector<32x256xf32>
    %57 = arith.maximumf %55, %56 : vector<32x256xf32>
    %cst_50 = arith.constant dense<0.000000e+00> : vector<32xf32>
    %58 = vector.multi_reduction <add>, %57, %cst_50 [1] : vector<32x256xf32> to vector<32xf32>
    %59 = vector.shape_cast %58 : vector<32xf32> to vector<32x1xf32>
    %60 = arith.addf %47, %59 : vector<32x1xf32>
    %c1_i32_51 = arith.constant 1 : i32
    %c0_52 = arith.constant 0 : index
    %c0_53 = arith.constant 0 : index
    %c0_54 = arith.constant 0 : index
    %c0_55 = arith.constant 0 : index
    %61 = vector.load %arg6[%c0_52, %c0_53, %c0_54, %c0_55] : memref<1x1x32x1xf32, #tpu.memory_space<vmem>>, vector<1x1x32x1xf32>
    %62 = vector.shape_cast %60 : vector<32x1xf32> to vector<1x1x32x1xf32>
    %63 = arith.addf %61, %62 : vector<1x1x32x1xf32>
    %c0_56 = arith.constant 0 : index
    %c0_57 = arith.constant 0 : index
    %c0_58 = arith.constant 0 : index
    %c0_59 = arith.constant 0 : index
    %64 = vector.load %arg6[%c0_56, %c0_57, %c0_58, %c0_59] : memref<1x1x32x1xf32, #tpu.memory_space<vmem>>, vector<1x1x32x1xf32>
    tpu.vector_store %arg6[%c0_56, %c0_57, %c0_58, %c0_59], %63 {strides = array<i32>} : memref<1x1x32x1xf32, #tpu.memory_space<vmem>>, vector<1x1x32x1xf32>,
    return
  }
  func.func @transform_0(%arg0: i32, %arg1: i32, %arg2: i32, %arg3: i32) -> (i32, i32, i32, i32) {
    %c1_i32 = arith.constant 1 : i32
    %0 = arith.muli %arg1, %c1_i32 : i32
    %1 = arith.addi %0, %arg2 : i32
    %c0_i32 = arith.constant 0 : i32
    %c0_i32_0 = arith.constant 0 : i32
    return %arg0, %1, %c0_i32, %arg3 : i32, i32, i32, i32
  }
  func.func @transform_1(%arg0: i32, %arg1: i32, %arg2: i32, %arg3: i32) -> (i32, i32) {
    %c0_i32 = arith.constant 0 : i32
    %c0_i32_0 = arith.constant 0 : i32
    %c0_i32_1 = arith.constant 0 : i32
    return %c0_i32, %c0_i32_0 : i32, i32
  }
  func.func @transform_2(%arg0: i32, %arg1: i32, %arg2: i32, %arg3: i32) -> (i32, i32, i32, i32) {
    %c0_i32 = arith.constant 0 : i32
    %c0_i32_0 = arith.constant 0 : i32
    %c0_i32_1 = arith.constant 0 : i32
    return %arg0, %arg1, %c0_i32, %c0_i32_0 : i32, i32, i32, i32
  }
}

</mosaic_0001>

<llo_original>
// kernel: tpu_custom_call.1
$region0: #{tpu_custom_call.1}
  #allocation0 [shape = 'u32[]', space=smem, size = 0x4, offset = 0x4, fixed_abs, tag = 'smem constant byte address 0x4 - core index']
  #allocation1 [shape = 'u32[144,128]{1,0:T(1,128)}', space=vmem, size = 0x12000, scoped, tag = 'internal scratch']
  #allocation2 [shape = 'f32[5,256]{1,0:T(8,128)}', space=vmem, size = 0x2000, scoped, tag = 'scratch operand']
  %s0 = inlined_call_operand.hbm [shape: f32[2,4,4,256], index: 0, kind: input, shape index: {}]
  %s1 = inlined_call_operand.vmem [shape: f32[32,5], index: 1, kind: input, shape index: {}]
  %s2 = inlined_call_operand.vmem [shape: f32[2,1,32,1], index: 2, kind: output, shape index: {}]
  %s3 = sld [smem:[#allocation0]]
  $region49: #{tpu_custom_call.1} parent=0
    _
  %s5 = ssub.s32 1, %s3
  %s6 = scalar_select 0, %s5, %s3
  $region1: #{tpu_custom_call.1} parent=0
    #allocation3 [shape = 'u8[32768]{0}', space=vmem, size = 0x8000, scoped, tag = 'input window, operand 0']
    #allocation4 [shape = 's32[2]{0}', space=sflag, size = 0x8, scoped, tag = 'scoped memory for tpu_custom_call.1']
    %7 = vsyncpa [#allocation4], 0
    %s8 = scalar_lea.sflag [#allocation4], 1
    %9 = vsyncpa %s8, 0
    loop: start=0, step=1, limit=4
    $region2: #{tpu_custom_call.1} parent=1 // loop_pre_header
      _
    $region3: #{tpu_custom_call.1} parent=1 // loop_header
      %s11 = sphi 0, %s15
      %p12 = scmp.ge.s32.totalorder %s11, 4
      %s18 = sphi 0, %s44
      %s19 = sphi 0, %s40
      %s20 = sphi 0, %s36
      %s21 = sphi 0, %s32
      %s22 = sphi 0, %s18
      %s23 = sphi 0, %s19
      %s24 = sphi 0, %s20
      %s25 = sphi 0, %s21
      %s26 = sphi 0, %s22
      %s27 = sphi 0, %s23
      %s28 = sphi 0, %s24
      %s29 = sphi 0, %s25
      %s53 = sphi 0, %s55
      %s56 = sphi 0, %s53
      %s57 = sphi 0, %s56
      %s73 = sphi 0, %s57
      %s77 = sphi 0, %s77
      %s79 = sphi 0, %s77
      %s80 = sphi 0, %s79
      %s94 = sphi 0, %s80
      %s102 = sphi 0, %s104
      %s105 = sphi 0, %s102
      %s106 = sphi 0, %s105
      %s122 = sphi 0, %s106
    $region4: #{tpu_custom_call.1} parent=1 // loop_header_branch
      %14 = sbr.rel (%p12) target = $region8
    $region5: #{tpu_custom_call.1} parent=1 // loop_body
      %s16 = ssub.s32 %s11, 1
      %s17 = ssub.s32 %s11, 2
      %s30 = sadd.s32 1, %s21
      %p31 = scmp.ge.s32.totalorder %s30, 1
      %s32 = scalar_select %p31, 0, %s30
      %s33 = sadd.s32 1, %s20
      %s34 = scalar_select %p31, %s33, %s20
      %p35 = scmp.ge.s32.totalorder %s34, 1
      %s36 = scalar_select %p35, 0, %s34
      %s37 = sadd.s32 1, %s19
      %s38 = scalar_select %p35, %s37, %s19
      %p39 = scmp.ge.s32.totalorder %s38, 1
      %s40 = scalar_select %p39, 0, %s38
      %s41 = sadd.s32 1, %s18
      %s42 = scalar_select %p39, %s41, %s18
      %p43 = scmp.ge.s32.totalorder %s42, 2
      %s44 = scalar_select %p43, 0, %s42
      %s45 = sadd.s32 %s19, %s20
      %s46 = sadd.s32 %s40, %s36
      %s47 = ssub.s32 %s18, %s44
      %s48 = ssub.s32 %s45, %s46
      %s49 = sor.u32 %s47, %s48
      %s50 = ssub.s32 %s21, %s32
      %s51 = sor.u32 %s49, %s50
      %p52 = scmp.eq.s32.totalorder %s51, 0
      %s54 = sadd.s32 %s53, 1
      %s55 = scalar_select %p52, %s53, %s54
      %p58 = pneg %p52
      %p59 = scmp.eq.s32.totalorder %s11, 1
      %p60 = por %p58, %p59
      %p61 = scmp.ne.s32.totalorder %s53, %s56
      %p62 = scmp.eq.s32.totalorder %s11, 0
      %p63 = por %p61, %p62
      %p64 = scmp.ne.s32.totalorder %s53, %s56
      %p65 = scmp.eq.s32.totalorder %s16, 1
      %p66 = por %p64, %p65
      %p67 = scmp.ne.s32.totalorder %s56, %s57
      %p68 = scmp.eq.s32.totalorder %s16, 0
      %p69 = por %p67, %p68
      %p70 = scmp.ne.s32.totalorder %s56, %s57
      %p71 = scmp.eq.s32.totalorder %s17, 1
      %p72 = por %p70, %p71
      %p74 = scmp.ne.s32.totalorder %s57, %s73
      %p75 = scmp.eq.s32.totalorder %s17, 0
      %p76 = por %p74, %p75
      %s78 = sadd.s32 %s77, 1
      %p81 = scmp.eq.s32.totalorder %s11, 1
      %p82 = scmp.ne.s32.totalorder %s77, %s79
      %p83 = scmp.eq.s32.totalorder %s11, 0
      %p84 = por %p82, %p83
      %p85 = scmp.ne.s32.totalorder %s77, %s79
      %p86 = scmp.eq.s32.totalorder %s16, 1
      %p87 = por %p85, %p86
      %p88 = scmp.ne.s32.totalorder %s79, %s80
      %p89 = scmp.eq.s32.totalorder %s16, 0
      %p90 = por %p88, %p89
      %p91 = scmp.ne.s32.totalorder %s79, %s80
      %p92 = scmp.eq.s32.totalorder %s17, 1
      %p93 = por %p91, %p92
      %p95 = scmp.ne.s32.totalorder %s80, %s94
      %p96 = scmp.eq.s32.totalorder %s17, 0
      %p97 = por %p95, %p96
      %s98 = ssub.s32 %s18, %s44
      %s99 = ssub.s32 %s19, %s40
      %s100 = sor.u32 %s98, %s99
      %p101 = scmp.eq.s32.totalorder %s100, 0
      %s103 = sadd.s32 %s102, 1
      %s104 = scalar_select %p101, %s102, %s103
      %p107 = pneg %p101
      %p108 = scmp.eq.s32.totalorder %s11, 1
      %p109 = por %p107, %p108
      %p110 = scmp.ne.s32.totalorder %s102, %s105
      %p111 = scmp.eq.s32.totalorder %s11, 0
      %p112 = por %p110, %p111
      %p113 = scmp.ne.s32.totalorder %s102, %s105
      %p114 = scmp.eq.s32.totalorder %s16, 1
      %p115 = por %p113, %p114
      %p116 = scmp.ne.s32.totalorder %s105, %s106
      %p117 = scmp.eq.s32.totalorder %s16, 0
      %p118 = por %p116, %p117
      %p119 = scmp.ne.s32.totalorder %s105, %s106
      %p120 = scmp.eq.s32.totalorder %s17, 1
      %p121 = por %p119, %p120
      %p123 = scmp.ne.s32.totalorder %s106, %s122
      %p124 = scmp.eq.s32.totalorder %s17, 0
      %p125 = por %p123, %p124
      %p126 = scmp.le.s32.totalorder 1, %s11
      %p127 = scmp.lt.s32.totalorder %s11, 3
      %p128 = pnand %p126, %p127
      %p129 = pneg %p128
      // Predicated region
      $region9: #{tpu_custom_call.1} parent=5 // pred_check
        _
      $region10: #{tpu_custom_call.1} parent=5 // pred_check_branch
        %131 = sbr.rel (%p128) target = $region12
      $region11: #{tpu_custom_call.1} parent=5 // pred_region
        %s132 = ssub.s32 %s11, 1
        // Predicated region
        $region13: #{tpu_custom_call.1} parent=11 // pred_check
          %p133 = pneg %p90
        $region14: #{tpu_custom_call.1} parent=11 // pred_check_branch
          %135 = sbr.rel (%p133) target = $region16
        $region15: #{tpu_custom_call.1} parent=11 // pred_region
          _
        $region16: #{tpu_custom_call.1} parent=11 // pred_fallthru
          _
      $region12: #{tpu_custom_call.1} parent=5 // pred_fallthru
        _
      %p136 = scmp.lt.s32.totalorder %s11, 2
      // Predicated region
      $region17: #{tpu_custom_call.1} parent=5 // pred_check
        %p137 = pneg %p136
      $region18: #{tpu_custom_call.1} parent=5 // pred_check_branch
        %139 = sbr.rel (%p137) target = $region20
      $region19: #{tpu_custom_call.1} parent=5 // pred_region
        // Predicated region
        $region21: #{tpu_custom_call.1} parent=19 // pred_check
          %p140 = pneg %p63
        $region22: #{tpu_custom_call.1} parent=19 // pred_check_branch
          %142 = sbr.rel (%p140) target = $region24
        $region23: #{tpu_custom_call.1} parent=19 // pred_region
          %s143 = sand.u32 %s53, 1
          %s144 = scalar_lea.sflag [#allocation4], %s143
          %s145 = sand.u32 %s53, 1
          %s146 = smul.addr %s145, 32
          %s147 = scalar_lea.vmem [#allocation3], %s146
          %s148 = sadd.s32 %s19, %s20
          %s149 = smul.u32 4, %s148
          %s150 = smul.u32 2, %s21
          %s152 = ssub.s32 512, 512
          %153 = vsyncadd %s144, %s152
          %s154 = smul.addr %s149, 2
          %s155 = sadd.s32 %s150, %s154
          %s156 = smul.addr %s18, 8
          %s157 = sadd.s32 %s155, %s156
          %s158 = smul.addr %s157, 64
          %s159 = scalar_lea.hbm %s0, %s158
          %s160 = sshll.u32 %s147, 4
          %s161 = int_to_ptr.vmem [resolvable:$true] %s160
          %166 = dma.hbm_to_vmem [thread:$0]  %s159, 512, %s161, %s144, 128, 128, 8
        $region24: #{tpu_custom_call.1} parent=19 // pred_fallthru
          _
      $region20: #{tpu_custom_call.1} parent=5 // pred_fallthru
        _
      %p167 = scmp.le.s32.totalorder 1, %s11
      %p168 = scmp.lt.s32.totalorder %s11, 3
      %p169 = pnand %p167, %p168
      %p170 = pneg %p169
      // Predicated region
      $region25: #{tpu_custom_call.1} parent=5 // pred_check
        _
      $region26: #{tpu_custom_call.1} parent=5 // pred_check_branch
        %172 = sbr.rel (%p169) target = $region28
      $region27: #{tpu_custom_call.1} parent=5 // pred_region
        %s173 = ssub.s32 %s11, 1
        %s174 = sand.u32 %s56, 1
        %s175 = scalar_lea.sflag [#allocation4], %s174
        %s176 = sand.u32 %s56, 1
        %s177 = smul.addr %s176, 32
        %s178 = scalar_lea.vmem [#allocation3], %s177
        // Predicated region
        $region29: #{tpu_custom_call.1} parent=27 // pred_check
          %p179 = pneg %p69
        $region30: #{tpu_custom_call.1} parent=27 // pred_check_branch
          %181 = sbr.rel (%p179) target = $region32
        $region31: #{tpu_custom_call.1} parent=27 // pred_region
          %182 = dma.done %s175, 512
        $region32: #{tpu_custom_call.1} parent=27 // pred_fallthru
          _
        %s183 = sand.u32 %s56, 1
        %s184 = scalar_lea.sflag [#allocation4], %s183
        %s185 = sand.u32 %s56, 1
        %s186 = smul.addr %s185, 32
        %s187 = scalar_lea.vmem [#allocation3], %s186
        %p188 = pneg %p69
        %p189 = pneg %p66
        %p190 = pneg %p90
        %p191 = pneg %p87
        %p192 = pneg %p118
        %p193 = pneg %p115
        %p194 = scmp.lt.s32.totalorder %s22, 1
        %s195 = scalar_select %p194, %s22, 1
        %p196 = scmp.lt.s32.totalorder %s23, 0
        %s197 = scalar_select %p196, %s23, 0
        %s198 = smul.addr %s197, 4
        %s199 = smul.addr %s195, 4
        %s200 = sadd.s32 %s198, %s199
        %s201 = smul.addr %s200, 8
        %s202 = scalar_lea.vmem %s2, %s201
        %s203 = sadd.s32 %s23, %s24
        %s204 = smul.u32 4, %s203
        %s205 = smul.u32 2, %s25
        %p206 = scmp.lt.s32.totalorder %s22, 1
        %s207 = scalar_select %p206, %s22, 1
        %p208 = scmp.lt.s32.totalorder %s23, 0
        %s209 = scalar_select %p208, %s23, 0
        %s210 = smul.addr %s209, 4
        %s211 = smul.addr %s207, 4
        %s212 = sadd.s32 %s210, %s211
        %s213 = smul.addr %s212, 8
        %s214 = scalar_lea.vmem %s2, %s213
        %p215 = scmp.eq.s32.totalorder %s24, 0
        %p216 = scmp.eq.s32.totalorder %s25, 0
        %p217 = pnand %p215, %p216
        %p218 = pneg %p217
        // Predicated region
        $region33: #{tpu_custom_call.1} parent=27 // pred_check
          _
        $region34: #{tpu_custom_call.1} parent=27 // pred_check_branch
          %220 = sbr.rel (%p217) target = $region36
        $region35: #{tpu_custom_call.1} parent=27 // pred_region
          %vm221 = vcmask 7168
          %222 = vst.msk [vmem:[%s214] sm:$0xff] %vm221, 0.0
          %223 = vst.msk [vmem:[%s214 + $0x8] sm:$0xff] %vm221, 0.0
          %224 = vst.msk [vmem:[%s214 + $0x10] sm:$0xff] %vm221, 0.0
          %225 = vst.msk [vmem:[%s214 + $0x18] sm:$0xff] %vm221, 0.0
        $region36: #{tpu_custom_call.1} parent=27 // pred_fallthru
          _
        %v226 = vld [vmem:[%s1] sm:$0xff]
        %v227 = vld [vmem:[%s1 + $0x8] sm:$0xff]
        %v228 = vld [vmem:[%s1 + $0x10] sm:$0xff]
        %v229 = vld [vmem:[%s1 + $0x18] sm:$0xff]
        %v230 = vlaneseq
        %vm231 = vcmp.ge.s32.totalorder %v230, 0
        %vm232 = vcmp.lt.s32.totalorder %v230, 256
        %vm233 = vmand %vm231, %vm232
        %s234 = scalar_lea.vmem [#allocation2], 4
        %235 = vst.msk [vmem:[%s234] ss:$8 sm:$0x3] %vm233, 1.0
        %236 = vst.msk [vmem:[%s234] ss:$8 sm:$0x0] %vm233, 1.0
        %v237 = vld [vmem:[%s178] sm:$0xff]
        %v239 = vcombine.high %v237, %v237
        %241 = vst [vmem:[#allocation2] sm:$0xf] %v237
        %242 = vst [vmem:[#allocation2 + $0x8] sm:$0xf] %v239
        %v243 = vld [vmem:[#allocation2] sm:$0x1f]
        %v244 = vld [vmem:[#allocation2 + $0x8] sm:$0x1f]
        %vm245 = vcmask 39936
        %v247 = vsel %vm245, %v226, 0
        %v250 = vsel %vm245, %v227, 0
        %v253 = vsel %vm245, %v228, 0
        %v256 = vsel %vm245, %v229, 0
        %vm258 = vcmask 1044480
        %v260 = vsel %vm258, %v243, 0
        %v263 = vsel %vm258, %v244, 0
        %265 = vmatprep.subr.mxu0 0.0
        %266 = vmatpush1.msra.mxu0 0.0
        %267 = vmatprep.subr.mxu0 0.0
        %268 = vmatpush1.msra.mxu0 0.0
        %269 = vmatprep.subr.mxu0 0.0
        %270 = vmatpush1.msra.mxu0 0.0
        %271 = vmatprep.subr.mxu0 0.0
        %272 = vmatpush1.msra.mxu0 0.0
        %273 = vmatprep.subr.mxu0 0.0
        %274 = vmatpush1.msra.mxu0 0.0
        %275 = vmatprep.subr.mxu0 0.0
        %276 = vmatpush1.msra.mxu0 0.0
        %277 = vmatprep.subr.mxu0 0.0
        %278 = vmatpush1.msra.mxu0 0.0
        %279 = vmatprep.subr.mxu0 0.0
        %280 = vmatpush1.msra.mxu0 0.0
        %281 = vmatprep.subr.mxu0 0.0
        %282 = vmatpush1.msra.mxu0 0.0
        %283 = vmatprep.subr.mxu0 0.0
        %284 = vmatpush1.msra.mxu0 0.0
        %285 = vmatprep.subr.mxu0 0.0
        %286 = vmatpush1.msra.mxu0 0.0
        %287 = vmatprep.subr.mxu0 0.0
        %288 = vmatpush1.msra.mxu0 0.0
        %289 = vmatprep.subr.mxu0 0.0
        %290 = vmatpush1.msra.mxu0 0.0
        %291 = vmatprep.subr.mxu0 0.0
        %292 = vmatpush1.msra.mxu0 0.0
        %293 = vmatprep.subr.mxu0 0.0
        %294 = vmatpush1.msra.mxu0 0.0
        %295 = vmatprep.subr.mxu0 %v263
        %296 = vmatpush1.msra.mxu0 %v260
        %297 = vmatprep.subr.mxu0 0.0
        %298 = vmatpush2.msra.mxu0 0.0
        %299 = vmatprep.subr.mxu0 0.0
        %300 = vmatpush2.msra.mxu0 0.0
        %301 = vmatprep.subr.mxu0 0.0
        %302 = vmatpush2.msra.mxu0 0.0
        %303 = vmatprep.subr.mxu0 0.0
        %304 = vmatpush2.msra.mxu0 0.0
        %305 = vmatprep.subr.mxu0 0.0
        %306 = vmatpush2.msra.mxu0 0.0
        %307 = vmatprep.subr.mxu0 0.0
        %308 = vmatpush2.msra.mxu0 0.0
        %309 = vmatprep.subr.mxu0 0.0
        %310 = vmatpush2.msra.mxu0 0.0
        %311 = vmatprep.subr.mxu0 0.0
        %312 = vmatpush2.msra.mxu0 0.0
        %313 = vmatprep.subr.mxu0 0.0
        %314 = vmatpush2.msra.mxu0 0.0
        %315 = vmatprep.subr.mxu0 0.0
        %316 = vmatpush2.msra.mxu0 0.0
        %317 = vmatprep.subr.mxu0 0.0
        %318 = vmatpush2.msra.mxu0 0.0
        %319 = vmatprep.subr.mxu0 0.0
        %320 = vmatpush2.msra.mxu0 0.0
        %321 = vmatprep.subr.mxu0 0.0
        %322 = vmatpush2.msra.mxu0 0.0
        %323 = vmatprep.subr.mxu0 0.0
        %324 = vmatpush2.msra.mxu0 0.0
        %325 = vmatprep.subr.mxu0 0.0
        %326 = vmatpush2.msra.mxu0 0.0
        %327 = vmatprep.subr.mxu0 0.0
        %328 = vmatpush2.msra.mxu0 0.0
        %329 = vmatprep.mubr.f32.mxu0 0.0
        %330 = vmatmul.mubr.f32.gmra.mxu0 %v247
        %v331 = vpop.f32.mrf.mxu0
        %v332 = vadd.f32 0.0, %v331
        %v333 = vpop.f32.mrf.mxu0
        %v334 = vadd.f32 0.0, %v333
        %335 = vmatprep.mubr.f32.mxu0 0.0
        %336 = vmatmul.mubr.f32.gmra.mxu0 %v250
        %v337 = vpop.f32.mrf.mxu0
        %v338 = vadd.f32 0.0, %v337
        %v339 = vpop.f32.mrf.mxu0
        %v340 = vadd.f32 0.0, %v339
        %341 = vmatprep.mubr.f32.mxu0 0.0
        %342 = vmatmul.mubr.f32.gmra.mxu0 %v253
        %v343 = vpop.f32.mrf.mxu0
        %v344 = vadd.f32 0.0, %v343
        %v345 = vpop.f32.mrf.mxu0
        %v346 = vadd.f32 0.0, %v345
        %347 = vmatprep.mubr.f32.mxu0 0.0
        %348 = vmatmul.mubr.f32.gmra.mxu0 %v256
        %v349 = vpop.f32.mrf.mxu0
        %v350 = vadd.f32 0.0, %v349
        %v351 = vpop.f32.mrf.mxu0
        %v352 = vadd.f32 0.0, %v351
        %353 = vdwg.mxu0
        %v354 = vmax.f32 %v332, 0.0
        %v355 = vmax.f32 %v334, 0.0
        %v356 = vmax.f32 %v338, 0.0
        %v357 = vmax.f32 %v340, 0.0
        %v358 = vmax.f32 %v344, 0.0
        %v359 = vmax.f32 %v346, 0.0
        %v360 = vmax.f32 %v350, 0.0
        %v361 = vmax.f32 %v352, 0.0
        %v362 = vadd.f32 %v354, %v355
        %363 = vadd.xlane.f32.xlu0 %v362
        %v364 = vpop.xlane.xlu0 %363
        %v365 = vadd.f32 %v356, %v357
        %366 = vadd.xlane.f32.xlu0 %v365
        %v367 = vpop.xlane.xlu0 %366
        %v368 = vadd.f32 %v358, %v359
        %369 = vadd.xlane.f32.xlu0 %v368
        %v370 = vpop.xlane.xlu0 %369
        %v371 = vadd.f32 %v360, %v361
        %372 = vadd.xlane.f32.xlu0 %v371
        %v373 = vpop.xlane.xlu0 %372
        %v374 = vadd.f32 %v364, 0.0
        %v375 = vadd.f32 %v367, 0.0
        %v376 = vadd.f32 %v370, 0.0
        %v377 = vadd.f32 %v373, 0.0
        %s378 = sadd.s32 0, 2
        %s379 = smul.addr %s378, 4
        %s380 = scalar_lea.vmem %s178, %s379 [#allocation3]
        %v381 = vld [vmem:[%s380] sm:$0xff]
        %v383 = vcombine.high %v381, %v381
        %385 = vst [vmem:[#allocation2] sm:$0xf] %v381
        %386 = vst [vmem:[#allocation2 + $0x8] sm:$0xf] %v383
        %v387 = vld [vmem:[#allocation2] sm:$0x1f]
        %v388 = vld [vmem:[#allocation2 + $0x8] sm:$0x1f]
        %v390 = vsel %vm258, %v387, 0
        %v393 = vsel %vm258, %v388, 0
        %395 = vmatprep.subr.mxu0 0.0
        %396 = vmatpush1.msra.mxu0 0.0
        %397 = vmatprep.subr.mxu0 0.0
        %398 = vmatpush1.msra.mxu0 0.0
        %399 = vmatprep.subr.mxu0 0.0
        %400 = vmatpush1.msra.mxu0 0.0
        %401 = vmatprep.subr.mxu0 0.0
        %402 = vmatpush1.msra.mxu0 0.0
        %403 = vmatprep.subr.mxu0 0.0
        %404 = vmatpush1.msra.mxu0 0.0
        %405 = vmatprep.subr.mxu0 0.0
        %406 = vmatpush1.msra.mxu0 0.0
        %407 = vmatprep.subr.mxu0 0.0
        %408 = vmatpush1.msra.mxu0 0.0
        %409 = vmatprep.subr.mxu0 0.0
        %410 = vmatpush1.msra.mxu0 0.0
        %411 = vmatprep.subr.mxu0 0.0
        %412 = vmatpush1.msra.mxu0 0.0
        %413 = vmatprep.subr.mxu0 0.0
        %414 = vmatpush1.msra.mxu0 0.0
        %415 = vmatprep.subr.mxu0 0.0
        %416 = vmatpush1.msra.mxu0 0.0
        %417 = vmatprep.subr.mxu0 0.0
        %418 = vmatpush1.msra.mxu0 0.0
        %419 = vmatprep.subr.mxu0 0.0
        %420 = vmatpush1.msra.mxu0 0.0
        %421 = vmatprep.subr.mxu0 0.0
        %422 = vmatpush1.msra.mxu0 0.0
        %423 = vmatprep.subr.mxu0 0.0
        %424 = vmatpush1.msra.mxu0 0.0
        %425 = vmatprep.subr.mxu0 %v393
        %426 = vmatpush1.msra.mxu0 %v390
        %427 = vmatprep.subr.mxu0 0.0
        %428 = vmatpush2.msra.mxu0 0.0
        %429 = vmatprep.subr.mxu0 0.0
        %430 = vmatpush2.msra.mxu0 0.0
        %431 = vmatprep.subr.mxu0 0.0
        %432 = vmatpush2.msra.mxu0 0.0
        %433 = vmatprep.subr.mxu0 0.0
        %434 = vmatpush2.msra.mxu0 0.0
        %435 = vmatprep.subr.mxu0 0.0
        %436 = vmatpush2.msra.mxu0 0.0
        %437 = vmatprep.subr.mxu0 0.0
        %438 = vmatpush2.msra.mxu0 0.0
        %439 = vmatprep.subr.mxu0 0.0
        %440 = vmatpush2.msra.mxu0 0.0
        %441 = vmatprep.subr.mxu0 0.0
        %442 = vmatpush2.msra.mxu0 0.0
        %443 = vmatprep.subr.mxu0 0.0
        %444 = vmatpush2.msra.mxu0 0.0
        %445 = vmatprep.subr.mxu0 0.0
        %446 = vmatpush2.msra.mxu0 0.0
        %447 = vmatprep.subr.mxu0 0.0
        %448 = vmatpush2.msra.mxu0 0.0
        %449 = vmatprep.subr.mxu0 0.0
        %450 = vmatpush2.msra.mxu0 0.0
        %451 = vmatprep.subr.mxu0 0.0
        %452 = vmatpush2.msra.mxu0 0.0
        %453 = vmatprep.subr.mxu0 0.0
        %454 = vmatpush2.msra.mxu0 0.0
        %455 = vmatprep.subr.mxu0 0.0
        %456 = vmatpush2.msra.mxu0 0.0
        %457 = vmatprep.subr.mxu0 0.0
        %458 = vmatpush2.msra.mxu0 0.0
        %459 = vmatprep.mubr.f32.mxu0 0.0
        %460 = vmatmul.mubr.f32.gmra.mxu0 %v247
        %v461 = vpop.f32.mrf.mxu0
        %v462 = vadd.f32 0.0, %v461
        %v463 = vpop.f32.mrf.mxu0
        %v464 = vadd.f32 0.0, %v463
        %465 = vmatprep.mubr.f32.mxu0 0.0
        %466 = vmatmul.mubr.f32.gmra.mxu0 %v250
        %v467 = vpop.f32.mrf.mxu0
        %v468 = vadd.f32 0.0, %v467
        %v469 = vpop.f32.mrf.mxu0
        %v470 = vadd.f32 0.0, %v469
        %471 = vmatprep.mubr.f32.mxu0 0.0
        %472 = vmatmul.mubr.f32.gmra.mxu0 %v253
        %v473 = vpop.f32.mrf.mxu0
        %v474 = vadd.f32 0.0, %v473
        %v475 = vpop.f32.mrf.mxu0
        %v476 = vadd.f32 0.0, %v475
        %477 = vmatprep.mubr.f32.mxu0 0.0
        %478 = vmatmul.mubr.f32.gmra.mxu0 %v256
        %v479 = vpop.f32.mrf.mxu0
        %v480 = vadd.f32 0.0, %v479
        %v481 = vpop.f32.mrf.mxu0
        %v482 = vadd.f32 0.0, %v481
        %483 = vdwg.mxu0
        %v484 = vmax.f32 %v462, 0.0
        %v485 = vmax.f32 %v464, 0.0
        %v486 = vmax.f32 %v468, 0.0
        %v487 = vmax.f32 %v470, 0.0
        %v488 = vmax.f32 %v474, 0.0
        %v489 = vmax.f32 %v476, 0.0
        %v490 = vmax.f32 %v480, 0.0
        %v491 = vmax.f32 %v482, 0.0
        %v492 = vadd.f32 %v484, %v485
        %493 = vadd.xlane.f32.xlu0 %v492
        %v494 = vpop.xlane.xlu0 %493
        %v495 = vadd.f32 %v486, %v487
        %496 = vadd.xlane.f32.xlu0 %v495
        %v497 = vpop.xlane.xlu0 %496
        %v498 = vadd.f32 %v488, %v489
        %499 = vadd.xlane.f32.xlu0 %v498
        %v500 = vpop.xlane.xlu0 %499
        %v501 = vadd.f32 %v490, %v491
        %502 = vadd.xlane.f32.xlu0 %v501
        %v503 = vpop.xlane.xlu0 %502
        %v504 = vadd.f32 %v374, %v494
        %v505 = vadd.f32 %v375, %v497
        %v506 = vadd.f32 %v376, %v500
        %v507 = vadd.f32 %v377, %v503
        %s508 = sadd.s32 0, 4
        %s509 = smul.addr %s508, 4
        %s510 = scalar_lea.vmem %s178, %s509 [#allocation3]
        %v511 = vld [vmem:[%s510] sm:$0xff]
        %v513 = vcombine.high %v511, %v511
        %515 = vst [vmem:[#allocation2] sm:$0xf] %v511
        %516 = vst [vmem:[#allocation2 + $0x8] sm:$0xf] %v513
        %v517 = vld [vmem:[#allocation2] sm:$0x1f]
        %v518 = vld [vmem:[#allocation2 + $0x8] sm:$0x1f]
        %v520 = vsel %vm258, %v517, 0
        %v523 = vsel %vm258, %v518, 0
        %525 = vmatprep.subr.mxu0 0.0
        %526 = vmatpush1.msra.mxu0 0.0
        %527 = vmatprep.subr.mxu0 0.0
        %528 = vmatpush1.msra.mxu0 0.0
        %529 = vmatprep.subr.mxu0 0.0
        %530 = vmatpush1.msra.mxu0 0.0
        %531 = vmatprep.subr.mxu0 0.0
        %532 = vmatpush1.msra.mxu0 0.0
        %533 = vmatprep.subr.mxu0 0.0
        %534 = vmatpush1.msra.mxu0 0.0
        %535 = vmatprep.subr.mxu0 0.0
        %536 = vmatpush1.msra.mxu0 0.0
        %537 = vmatprep.subr.mxu0 0.0
        %538 = vmatpush1.msra.mxu0 0.0
        %539 = vmatprep.subr.mxu0 0.0
        %540 = vmatpush1.msra.mxu0 0.0
        %541 = vmatprep.subr.mxu0 0.0
        %542 = vmatpush1.msra.mxu0 0.0
        %543 = vmatprep.subr.mxu0 0.0
        %544 = vmatpush1.msra.mxu0 0.0
        %545 = vmatprep.subr.mxu0 0.0
        %546 = vmatpush1.msra.mxu0 0.0
        %547 = vmatprep.subr.mxu0 0.0
        %548 = vmatpush1.msra.mxu0 0.0
        %549 = vmatprep.subr.mxu0 0.0
        %550 = vmatpush1.msra.mxu0 0.0
        %551 = vmatprep.subr.mxu0 0.0
        %552 = vmatpush1.msra.mxu0 0.0
        %553 = vmatprep.subr.mxu0 0.0
        %554 = vmatpush1.msra.mxu0 0.0
        %555 = vmatprep.subr.mxu0 %v523
        %556 = vmatpush1.msra.mxu0 %v520
        %557 = vmatprep.subr.mxu0 0.0
        %558 = vmatpush2.msra.mxu0 0.0
        %559 = vmatprep.subr.mxu0 0.0
        %560 = vmatpush2.msra.mxu0 0.0
        %561 = vmatprep.subr.mxu0 0.0
        %562 = vmatpush2.msra.mxu0 0.0
        %563 = vmatprep.subr.mxu0 0.0
        %564 = vmatpush2.msra.mxu0 0.0
        %565 = vmatprep.subr.mxu0 0.0
        %566 = vmatpush2.msra.mxu0 0.0
        %567 = vmatprep.subr.mxu0 0.0
        %568 = vmatpush2.msra.mxu0 0.0
        %569 = vmatprep.subr.mxu0 0.0
        %570 = vmatpush2.msra.mxu0 0.0
        %571 = vmatprep.subr.mxu0 0.0
        %572 = vmatpush2.msra.mxu0 0.0
        %573 = vmatprep.subr.mxu0 0.0
        %574 = vmatpush2.msra.mxu0 0.0
        %575 = vmatprep.subr.mxu0 0.0
        %576 = vmatpush2.msra.mxu0 0.0
        %577 = vmatprep.subr.mxu0 0.0
        %578 = vmatpush2.msra.mxu0 0.0
        %579 = vmatprep.subr.mxu0 0.0
        %580 = vmatpush2.msra.mxu0 0.0
        %581 = vmatprep.subr.mxu0 0.0
        %582 = vmatpush2.msra.mxu0 0.0
        %583 = vmatprep.subr.mxu0 0.0
        %584 = vmatpush2.msra.mxu0 0.0
        %585 = vmatprep.subr.mxu0 0.0
        %586 = vmatpush2.msra.mxu0 0.0
        %587 = vmatprep.subr.mxu0 0.0
        %588 = vmatpush2.msra.mxu0 0.0
        %589 = vmatprep.mubr.f32.mxu0 0.0
        %590 = vmatmul.mubr.f32.gmra.mxu0 %v247
        %v591 = vpop.f32.mrf.mxu0
        %v592 = vadd.f32 0.0, %v591
        %v593 = vpop.f32.mrf.mxu0
        %v594 = vadd.f32 0.0, %v593
        %595 = vmatprep.mubr.f32.mxu0 0.0
        %596 = vmatmul.mubr.f32.gmra.mxu0 %v250
        %v597 = vpop.f32.mrf.mxu0
        %v598 = vadd.f32 0.0, %v597
        %v599 = vpop.f32.mrf.mxu0
        %v600 = vadd.f32 0.0, %v599
        %601 = vmatprep.mubr.f32.mxu0 0.0
        %602 = vmatmul.mubr.f32.gmra.mxu0 %v253
        %v603 = vpop.f32.mrf.mxu0
        %v604 = vadd.f32 0.0, %v603
        %v605 = vpop.f32.mrf.mxu0
        %v606 = vadd.f32 0.0, %v605
        %607 = vmatprep.mubr.f32.mxu0 0.0
        %608 = vmatmul.mubr.f32.gmra.mxu0 %v256
        %v609 = vpop.f32.mrf.mxu0
        %v610 = vadd.f32 0.0, %v609
        %v611 = vpop.f32.mrf.mxu0
        %v612 = vadd.f32 0.0, %v611
        %613 = vdwg.mxu0
        %v614 = vmax.f32 %v592, 0.0
        %v615 = vmax.f32 %v594, 0.0
        %v616 = vmax.f32 %v598, 0.0
        %v617 = vmax.f32 %v600, 0.0
        %v618 = vmax.f32 %v604, 0.0
        %v619 = vmax.f32 %v606, 0.0
        %v620 = vmax.f32 %v610, 0.0
        %v621 = vmax.f32 %v612, 0.0
        %v622 = vadd.f32 %v614, %v615
        %623 = vadd.xlane.f32.xlu0 %v622
        %v624 = vpop.xlane.xlu0 %623
        %v625 = vadd.f32 %v616, %v617
        %626 = vadd.xlane.f32.xlu0 %v625
        %v627 = vpop.xlane.xlu0 %626
        %v628 = vadd.f32 %v618, %v619
        %629 = vadd.xlane.f32.xlu0 %v628
        %v630 = vpop.xlane.xlu0 %629
        %v631 = vadd.f32 %v620, %v621
        %632 = vadd.xlane.f32.xlu0 %v631
        %v633 = vpop.xlane.xlu0 %632
        %v634 = vadd.f32 %v504, %v624
        %v635 = vadd.f32 %v505, %v627
        %v636 = vadd.f32 %v506, %v630
        %v637 = vadd.f32 %v507, %v633
        %s638 = sadd.s32 0, 6
        %s639 = smul.addr %s638, 4
        %s640 = scalar_lea.vmem %s178, %s639 [#allocation3]
        %v641 = vld [vmem:[%s640] sm:$0xff]
        %v643 = vcombine.high %v641, %v641
        %645 = vst [vmem:[#allocation2] sm:$0xf] %v641
        %646 = vst [vmem:[#allocation2 + $0x8] sm:$0xf] %v643
        %v647 = vld [vmem:[#allocation2] sm:$0x1f]
        %v648 = vld [vmem:[#allocation2 + $0x8] sm:$0x1f]
        %v650 = vsel %vm258, %v647, 0
        %v653 = vsel %vm258, %v648, 0
        %655 = vmatprep.subr.mxu0 0.0
        %656 = vmatpush1.msra.mxu0 0.0
        %657 = vmatprep.subr.mxu0 0.0
        %658 = vmatpush1.msra.mxu0 0.0
        %659 = vmatprep.subr.mxu0 0.0
        %660 = vmatpush1.msra.mxu0 0.0
        %661 = vmatprep.subr.mxu0 0.0
        %662 = vmatpush1.msra.mxu0 0.0
        %663 = vmatprep.subr.mxu0 0.0
        %664 = vmatpush1.msra.mxu0 0.0
        %665 = vmatprep.subr.mxu0 0.0
        %666 = vmatpush1.msra.mxu0 0.0
        %667 = vmatprep.subr.mxu0 0.0
        %668 = vmatpush1.msra.mxu0 0.0
        %669 = vmatprep.subr.mxu0 0.0
        %670 = vmatpush1.msra.mxu0 0.0
        %671 = vmatprep.subr.mxu0 0.0
        %672 = vmatpush1.msra.mxu0 0.0
        %673 = vmatprep.subr.mxu0 0.0
        %674 = vmatpush1.msra.mxu0 0.0
        %675 = vmatprep.subr.mxu0 0.0
        %676 = vmatpush1.msra.mxu0 0.0
        %677 = vmatprep.subr.mxu0 0.0
        %678 = vmatpush1.msra.mxu0 0.0
        %679 = vmatprep.subr.mxu0 0.0
        %680 = vmatpush1.msra.mxu0 0.0
        %681 = vmatprep.subr.mxu0 0.0
        %682 = vmatpush1.msra.mxu0 0.0
        %683 = vmatprep.subr.mxu0 0.0
        %684 = vmatpush1.msra.mxu0 0.0
        %685 = vmatprep.subr.mxu0 %v653
        %686 = vmatpush1.msra.mxu0 %v650
        %687 = vmatprep.subr.mxu0 0.0
        %688 = vmatpush2.msra.mxu0 0.0
        %689 = vmatprep.subr.mxu0 0.0
        %690 = vmatpush2.msra.mxu0 0.0
        %691 = vmatprep.subr.mxu0 0.0
        %692 = vmatpush2.msra.mxu0 0.0
        %693 = vmatprep.subr.mxu0 0.0
        %694 = vmatpush2.msra.mxu0 0.0
        %695 = vmatprep.subr.mxu0 0.0
        %696 = vmatpush2.msra.mxu0 0.0
        %697 = vmatprep.subr.mxu0 0.0
        %698 = vmatpush2.msra.mxu0 0.0
        %699 = vmatprep.subr.mxu0 0.0
        %700 = vmatpush2.msra.mxu0 0.0
        %701 = vmatprep.subr.mxu0 0.0
        %702 = vmatpush2.msra.mxu0 0.0
        %703 = vmatprep.subr.mxu0 0.0
        %704 = vmatpush2.msra.mxu0 0.0
        %705 = vmatprep.subr.mxu0 0.0
        %706 = vmatpush2.msra.mxu0 0.0
        %707 = vmatprep.subr.mxu0 0.0
        %708 = vmatpush2.msra.mxu0 0.0
        %709 = vmatprep.subr.mxu0 0.0
        %710 = vmatpush2.msra.mxu0 0.0
        %711 = vmatprep.subr.mxu0 0.0
        %712 = vmatpush2.msra.mxu0 0.0
        %713 = vmatprep.subr.mxu0 0.0
        %714 = vmatpush2.msra.mxu0 0.0
        %715 = vmatprep.subr.mxu0 0.0
        %716 = vmatpush2.msra.mxu0 0.0
        %717 = vmatprep.subr.mxu0 0.0
        %718 = vmatpush2.msra.mxu0 0.0
        %719 = vmatprep.mubr.f32.mxu0 0.0
        %720 = vmatmul.mubr.f32.gmra.mxu0 %v247
        %v721 = vpop.f32.mrf.mxu0
        %v722 = vadd.f32 0.0, %v721
        %v723 = vpop.f32.mrf.mxu0
        %v724 = vadd.f32 0.0, %v723
        %725 = vmatprep.mubr.f32.mxu0 0.0
        %726 = vmatmul.mubr.f32.gmra.mxu0 %v250
        %v727 = vpop.f32.mrf.mxu0
        %v728 = vadd.f32 0.0, %v727
        %v729 = vpop.f32.mrf.mxu0
        %v730 = vadd.f32 0.0, %v729
        %731 = vmatprep.mubr.f32.mxu0 0.0
        %732 = vmatmul.mubr.f32.gmra.mxu0 %v253
        %v733 = vpop.f32.mrf.mxu0
        %v734 = vadd.f32 0.0, %v733
        %v735 = vpop.f32.mrf.mxu0
        %v736 = vadd.f32 0.0, %v735
        %737 = vmatprep.mubr.f32.mxu0 0.0
        %738 = vmatmul.mubr.f32.gmra.mxu0 %v256
        %v739 = vpop.f32.mrf.mxu0
        %v740 = vadd.f32 0.0, %v739
        %v741 = vpop.f32.mrf.mxu0
        %v742 = vadd.f32 0.0, %v741
        %743 = vdwg.mxu0
        %v744 = vmax.f32 %v722, 0.0
        %v745 = vmax.f32 %v724, 0.0
        %v746 = vmax.f32 %v728, 0.0
        %v747 = vmax.f32 %v730, 0.0
        %v748 = vmax.f32 %v734, 0.0
        %v749 = vmax.f32 %v736, 0.0
        %v750 = vmax.f32 %v740, 0.0
        %v751 = vmax.f32 %v742, 0.0
        %v752 = vadd.f32 %v744, %v745
        %753 = vadd.xlane.f32.xlu0 %v752
        %v754 = vpop.xlane.xlu0 %753
        %v755 = vadd.f32 %v746, %v747
        %756 = vadd.xlane.f32.xlu0 %v755
        %v757 = vpop.xlane.xlu0 %756
        %v758 = vadd.f32 %v748, %v749
        %759 = vadd.xlane.f32.xlu0 %v758
        %v760 = vpop.xlane.xlu0 %759
        %v761 = vadd.f32 %v750, %v751
        %762 = vadd.xlane.f32.xlu0 %v761
        %v763 = vpop.xlane.xlu0 %762
        %v764 = vadd.f32 %v634, %v754
        %v765 = vadd.f32 %v635, %v757
        %v766 = vadd.f32 %v636, %v760
        %v767 = vadd.f32 %v637, %v763
        %v768 = vld [vmem:[%s214] sm:$0xff]
        %v769 = vld [vmem:[%s214 + $0x8] sm:$0xff]
        %v770 = vld [vmem:[%s214 + $0x10] sm:$0xff]
        %v771 = vld [vmem:[%s214 + $0x18] sm:$0xff]
        %v772 = vadd.f32 %v768, %v764
        %v773 = vadd.f32 %v769, %v765
        %v774 = vadd.f32 %v770, %v766
        %v775 = vadd.f32 %v771, %v767
        %vm776 = vcmask 7168
        %777 = vst.msk [vmem:[%s214] sm:$0xff] %vm776, %v772
        %778 = vst.msk [vmem:[%s214 + $0x8] sm:$0xff] %vm776, %v773
        %779 = vst.msk [vmem:[%s214 + $0x10] sm:$0xff] %vm776, %v774
        %780 = vst.msk [vmem:[%s214 + $0x18] sm:$0xff] %vm776, %v775
        %p781 = scmp.lt.s32.totalorder %s22, 1
        %s782 = scalar_select %p781, %s22, 1
        %p783 = scmp.lt.s32.totalorder %s23, 0
        %s784 = scalar_select %p783, %s23, 0
        %s785 = smul.addr %s784, 4
        %s786 = smul.addr %s782, 4
        %s787 = sadd.s32 %s785, %s786
        %s788 = smul.addr %s787, 8
        %s789 = scalar_lea.vmem %s2, %s788
        // Predicated region
        $region37: #{tpu_custom_call.1} parent=27 // pred_check
          %p790 = pneg %p115
        $region38: #{tpu_custom_call.1} parent=27 // pred_check_branch
          %792 = sbr.rel (%p790) target = $region40
        $region39: #{tpu_custom_call.1} parent=27 // pred_region
          _
        $region40: #{tpu_custom_call.1} parent=27 // pred_fallthru
          _
      $region28: #{tpu_custom_call.1} parent=5 // pred_fallthru
        _
      %p793 = scmp.le.s32.totalorder 2, %s11
      // Predicated region
      $region41: #{tpu_custom_call.1} parent=5 // pred_check
        %p794 = pneg %p793
      $region42: #{tpu_custom_call.1} parent=5 // pred_check_branch
        %796 = sbr.rel (%p794) target = $region44
      $region43: #{tpu_custom_call.1} parent=5 // pred_region
        %s797 = ssub.s32 %s11, 2
        // Predicated region
        $region45: #{tpu_custom_call.1} parent=43 // pred_check
          %p798 = pneg %p121
        $region46: #{tpu_custom_call.1} parent=43 // pred_check_branch
          %800 = sbr.rel (%p798) target = $region48
        $region47: #{tpu_custom_call.1} parent=43 // pred_region
          %p801 = scmp.lt.s32.totalorder %s26, 1
          %s802 = scalar_select %p801, %s26, 1
          %p803 = scmp.lt.s32.totalorder %s27, 0
          %s804 = scalar_select %p803, %s27, 0
          %s805 = smul.addr %s804, 4
          %s806 = smul.addr %s802, 4
          %s807 = sadd.s32 %s805, %s806
          %s808 = smul.addr %s807, 8
          %s809 = scalar_lea.vmem %s2, %s808
        $region48: #{tpu_custom_call.1} parent=43 // pred_fallthru
          _
      $region44: #{tpu_custom_call.1} parent=5 // pred_fallthru
        _
    $region6: #{tpu_custom_call.1} parent=1 // loop_footer
      %s15 = sadd.s32 1, %s11
    $region7: #{tpu_custom_call.1} parent=1 // loop_footer_branch
      %10 = sbr.rel target = $region3
    $region8: #{tpu_custom_call.1} parent=1 // loop_exit
      _
    %810 = vsyncpa [#allocation4], 1
    %s811 = scalar_lea.sflag [#allocation4], 1
    %812 = vsyncpa %s811, 1

</llo_original>
